<compile_context>
chip_gen: v6e
topology: v6e:2x2x1
jax: 0.10.0
libtpu: 0.0.40
codegen_flags: <defaults>
</compile_context>

<pallas_src>
import functools

import jax
import jax.numpy as jnp
from jax.experimental import pallas as pl
from jax.experimental.pallas import tpu as pltpu


# ----------------------------------------------------------------------------
# Shared in-kernel conv accumulation: k*k shifted MXU matmuls on a slab
# ----------------------------------------------------------------------------
def _conv_taps(x_ref, w_ref, *, k, stride, cin, toh, wq):
    # x_ref : (1, s*s*Cin, Lslab)  bf16 phase-split halo'd input slab
    # w_ref : (k*k, Cout, Cin)     bf16 conv taps (VMEM-resident)
    # returns (Cout, TOH*Wq) f32 conv result WITHOUT bias.
    l = toh * wq
    acc = None
    for di in range(k):
        for dj in range(k):
            phase = (di % stride) * stride + (dj % stride)
            start = (di // stride) * wq + (dj // stride)
            win = x_ref[0, phase * cin:(phase + 1) * cin, start:start + l]
            part = jnp.dot(w_ref[di * k + dj], win,
                           preferred_element_type=jnp.float32)
            acc = part if acc is None else acc + part
    return acc


# ----------------------------------------------------------------------------
# Pass 1: conv + per-tile partial BN statistics (no activation written to HBM)
# ----------------------------------------------------------------------------
def _conv_stats_kernel(x_ref, w_ref, stat_ref, *, k, stride, cin, toh, wq, ow):
    acc = _conv_taps(x_ref, w_ref, k=k, stride=stride, cin=cin, toh=toh, wq=wq)
    l = toh * wq
    lane = jax.lax.broadcasted_iota(jnp.int32, (1, l), 1)
    valid = (lane % wq) < ow                 # mask flat-GEMM garbage columns
    yc = jnp.where(valid, acc, 0.0)          # bias-centered stats (bias-free)
    stat_ref[0, :, 0:1] = jnp.sum(yc, axis=1, keepdims=True)
    stat_ref[0, :, 1:2] = jnp.sum(yc * yc, axis=1, keepdims=True)


# ----------------------------------------------------------------------------
# Pass 2: recompute conv, BN affine (pre-folded scale/shift) + LeakyReLU,
#         store directly as NCHW output blocks
# ----------------------------------------------------------------------------
def _conv_bn_lrelu_kernel(x_ref, w_ref, scale_ref, shift_ref, o_ref, *,
                          k, stride, cin, toh, wq, ow, negative_slope):
    acc = _conv_taps(x_ref, w_ref, k=k, stride=stride, cin=cin, toh=toh, wq=wq)
    z = acc * scale_ref[...] + shift_ref[...]        # (Cout, L)*(Cout,1)+(Cout,1)
    z = jnp.where(z >= 0, z, negative_slope * z)     # LeakyReLU(0.2)
    # Store the valid columns of each output row straight into the NCHW block.
    # TODO(synk): for very large OH tiles, replace this unrolled loop with a
    #             fori_loop + dynamic lane slice.
    for r in range(toh):
        o_ref[0, :, r, :] = z[:, r * wq:r * wq + ow].astype(o_ref.dtype)


# ----------------------------------------------------------------------------
# Host-side glue
# ----------------------------------------------------------------------------
def _pick_oh_tile(oh, target):
    """Largest multiple-of-8 divisor of OH that is <= target ((8,128)-safe);
    falls back to OH itself (block == full dim is always legal)."""
    target = max(1, min(int(target), oh))
    divs8 = [d for d in range(8, oh + 1, 8) if oh % d == 0]
    if not divs8:
        return oh
    under = [d for d in divs8 if d <= target]
    return max(under) if under else min(divs8)


def conv_block2_forward(x, weight, bias, gamma, beta, *, stride, padding,
                        eps=1e-5, negative_slope=0.2, block_oh=None):
    """x: (N, Cin, H, W) NCHW; weight: (Cout, Cin, k, k).  Returns NCHW f32."""
    del bias  # the conv bias cancels exactly under training-mode BatchNorm
    N, Cin, H, W = x.shape
    Cout, _, k, _ = weight.shape
    s, p = int(stride), int(padding)
    Hp, Wp = H + 2 * p, W + 2 * p
    OH = (Hp - k) // s + 1
    OW = (Wp - k) // s + 1
    eh = (k - 1) // s                       # row/col halo (in phase-rows)
    Hq = -(-Hp // s)                        # ceil(Hp / s)
    Wq = -(-Wp // s)

    # ---- phase-split padded input (NCHW native, bf16, no im2col) ------------
    xb = x.astype(jnp.bfloat16)             # bf16 MXU operands (review)
    xp = jnp.pad(xb, ((0, 0), (0, 0),
                      (p, Hq * s - H - p), (p, Wq * s - W - p)))
    xph = xp.reshape(N, Cin, Hq, s, Wq, s).transpose(0, 3, 5, 1, 2, 4)
    C2 = s * s * Cin
    flat = xph.reshape(N, C2, Hq * Wq)      # flat[(r0*s+c0)*Cin+ci, hq*Wq+wq]

    # ---- per-(image, OH-tile) slabs with a small row halo --------------------
    toh = _pick_oh_tile(OH, block_oh if block_oh else OH)
    T = OH // toh
    L = toh * Wq
    Lslab = (toh + eh) * Wq + eh
    need = (T - 1) * toh * Wq + Lslab
    if need > flat.shape[-1]:
        flat = jnp.pad(flat, ((0, 0), (0, 0), (0, need - flat.shape[-1])))
    if T == 1:
        slabs = flat[:, :, :Lslab]
    else:
        slabs = jnp.stack([flat[:, :, t * toh * Wq:t * toh * Wq + Lslab]
                           for t in range(T)], axis=1).reshape(N * T, C2, Lslab)
    G = N * T                                # >= 2 parallel grid steps (v7x)

    # ---- conv weight as k*k VMEM-resident (Cout, Cin) taps, bf16 ------------
    w_taps = jnp.transpose(weight, (2, 3, 0, 1)).reshape(k * k, Cout, Cin)
    w_taps = w_taps.astype(jnp.bfloat16)

    cparams = pltpu.CompilerParams(dimension_semantics=("parallel",),
                                   vmem_limit_bytes=48 * 1024 * 1024)

    # ---- pass 1: partial BN statistics ---------------------------------------
    kernel1 = functools.partial(_conv_stats_kernel, k=k, stride=s, cin=Cin,
                                toh=toh, wq=Wq, ow=OW)
    flops_conv = 2 * G * k * k * Cout * Cin * L
    stats = pl.pallas_call(
        kernel1,
        grid=(G,),
        in_specs=[
            pl.BlockSpec((1, C2, Lslab), lambda g: (g, 0, 0)),
            pl.BlockSpec((k * k, Cout, Cin), lambda g: (0, 0, 0)),  # resident
        ],
        out_specs=pl.BlockSpec((1, Cout, 2), lambda g: (g, 0, 0)),
        out_shape=jax.ShapeDtypeStruct((G, Cout, 2), jnp.float32),
        compiler_params=cparams,
        cost_estimate=pl.CostEstimate(
            flops=flops_conv, transcendentals=0,
            bytes_accessed=slabs.size * 2 + w_taps.size * 2 + G * Cout * 8),
    )(slabs, w_taps)

    # ---- tiny XLA epilogue: fold batch stats + BN params into scale/shift ----
    M = N * OH * OW
    ps = jnp.sum(stats, axis=0)                     # (Cout, 2)
    mean_c = ps[:, 0] / M                           # mean of bias-free conv
    var = jnp.maximum(ps[:, 1] / M - mean_c * mean_c, 0.0)
    inv_std = jax.lax.rsqrt(var + eps)
    g32 = gamma.astype(jnp.float32)
    scale = (g32 * inv_std).reshape(Cout, 1)
    shift = (beta.astype(jnp.float32) - mean_c * g32 * inv_std).reshape(Cout, 1)

    # ---- pass 2: recompute conv + BN affine + LeakyReLU -> NCHW output ------
    kernel2 = functools.partial(_conv_bn_lrelu_kernel, k=k, stride=s, cin=Cin,
                                toh=toh, wq=Wq, ow=OW,
                                negative_slope=negative_slope)
    out = pl.pallas_call(
        kernel2,
        grid=(G,),
        in_specs=[
            pl.BlockSpec((1, C2, Lslab), lambda g: (g, 0, 0)),
            pl.BlockSpec((k * k, Cout, Cin), lambda g: (0, 0, 0)),  # resident
            pl.BlockSpec((Cout, 1), lambda g: (0, 0)),              # resident
            pl.BlockSpec((Cout, 1), lambda g: (0, 0)),              # resident
        ],
        out_specs=pl.BlockSpec((1, Cout, toh, OW),
                               lambda g: (g // T, 0, g % T, 0)),
        out_shape=jax.ShapeDtypeStruct((N, Cout, OH, OW), jnp.float32),
        compiler_params=cparams,
        cost_estimate=pl.CostEstimate(
            flops=flops_conv + 4 * G * Cout * L, transcendentals=0,
            bytes_accessed=slabs.size * 2 + w_taps.size * 2
                           + N * Cout * OH * OW * 4),
    )(slabs, w_taps, scale, shift)
    return out


# ----------------------------------------------------------------------------
# Reference forward for validation (same deliberate bf16 cast of MXU operands)
# ----------------------------------------------------------------------------
def _reference_forward(x, weight, bias, gamma, beta, *, stride, padding,
                       eps=1e-5, negative_slope=0.2):
    xf = x.astype(jnp.bfloat16).astype(jnp.float32)
    wf = weight.astype(jnp.bfloat16).astype(jnp.float32)
    y = jax.lax.conv_general_dilated(
        xf, wf, window_strides=(stride, stride),
        padding=((padding, padding), (padding, padding)),
        dimension_numbers=("NCHW", "OIHW", "NCHW"),
        precision=jax.lax.Precision.HIGHEST)
    y = y + bias.reshape(1, -1, 1, 1).astype(jnp.float32)
    mean = jnp.mean(y, axis=(0, 2, 3), keepdims=True)
    var = jnp.mean((y - mean) ** 2, axis=(0, 2, 3), keepdims=True)
    z = (y - mean) * jax.lax.rsqrt(var + eps)
    z = z * gamma.reshape(1, -1, 1, 1) + beta.reshape(1, -1, 1, 1)
    return jnp.where(z >= 0, z, negative_slope * z)


# ----------------------------------------------------------------------------
# Deterministic parameter init (PyTorch-style shapes / defaults)
# ----------------------------------------------------------------------------
def init_params(key, channels_in, channels_out, kernel_size):
    k_w, k_b = jax.random.split(key)
    fan_in = channels_in * kernel_size * kernel_size
    bound = 1.0 / jnp.sqrt(fan_in)
    weight = jax.random.uniform(
        k_w, (channels_out, channels_in, kernel_size, kernel_size),
        jnp.float32, -bound, bound)
    bias = jax.random.uniform(k_b, (channels_out,), jnp.float32, -bound, bound)
    gamma = jnp.ones((channels_out,), jnp.float32)            # BN weight
    beta = jnp.zeros((channels_out,), jnp.float32)            # BN bias
    return weight, bias, gamma, beta


if __name__ == "__main__":
    key = jax.random.PRNGKey(0)
    k_x, k_p = jax.random.split(key)

    # ConvBlock2(channels_in=4, channels_out=8, kernel, stride, padding)
    cin, cout = 4, 8
    x = jax.random.normal(k_x, (2, cin, 16, 16), jnp.float32)        # NCHW

    configs = [
        # (kernel, stride, padding, block_oh)
        (3, 1, 1, 8),      # 2 OH-tiles per image -> 4 parallel grid steps
        (3, 1, 1, None),   # whole image per slab -> 2 parallel grid steps
        (4, 2, 1, None),   # stride-2 path (phase decomposition), 2 steps
    ]

    for ksz, stride, padding, boh in configs:
        weight, bias, gamma, beta = init_params(k_p, cin, cout, ksz)
        y = conv_block2_forward(x, weight, bias, gamma, beta,
                                stride=stride, padding=padding, block_oh=boh)
        y = jax.block_until_ready(y)

        y_ref = jax.block_until_ready(
            _reference_forward(x, weight, bias, gamma, beta,
                               stride=stride, padding=padding))

        assert y.shape == y_ref.shape, (y.shape, y_ref.shape)
        assert bool(jnp.all(jnp.isfinite(y)))
        max_err = float(jnp.max(jnp.abs(y - y_ref)))
        assert max_err < 5e-3, (
            f"max_err={max_err} for cfg k={ksz} s={stride} block_oh={boh}")

    print("KERNEL_OK")
</pallas_src>

<mosaic_0001>
module attributes {stable_mosaic.version = 11 : i64} {
  func.func @_conv_stats_kernel(%arg0: i32, %arg1: memref<1x4x182xbf16, #tpu.memory_space<vmem>>, %arg2: memref<9x8x4xbf16, #tpu.memory_space<vmem>>, %arg3: memref<1x8x2xf32, #tpu.memory_space<vmem>>) attributes {dimension_semantics = [#tpu.dimension_semantics<parallel>], iteration_bounds = array<i64: 4>, scalar_prefetch = 0 : i64, scratch_operands = 0 : i64, tpu.core_type = #tpu.core_type<tc>, window_params = [{transform_indices = @transform_0, window_bounds = array<i64: 1, 4, 182>}, {pipeline_mode = #tpu.pipeline_mode<synchronous>, transform_indices = @transform_1, window_bounds = array<i64: 9, 8, 4>}, {transform_indices = @transform_2, window_bounds = array<i64: 1, 8, 2>}]} {
    %c0 = arith.constant 0 : index
    %c0_0 = arith.constant 0 : index
    %c0_1 = arith.constant 0 : index
    %0 = vector.load %arg1[%c0, %c0_0, %c0_1] : memref<1x4x182xbf16, #tpu.memory_space<vmem>>, vector<1x4x144xbf16>
    %1 = vector.shape_cast %0 : vector<1x4x144xbf16> to vector<4x144xbf16>
    %c0_2 = arith.constant 0 : index
    %c0_3 = arith.constant 0 : index
    %c0_4 = arith.constant 0 : index
    %2 = vector.load %arg2[%c0_2, %c0_3, %c0_4] : memref<9x8x4xbf16, #tpu.memory_space<vmem>>, vector<1x8x4xbf16>
    %3 = vector.shape_cast %2 : vector<1x8x4xbf16> to vector<8x4xbf16>
    %cst = arith.constant dense<0.000000e+00> : vector<8x144xf32>
    %4 = tpu.matmul %3, %1, %cst {dimension_numbers = #tpu.dot_dimension_numbers<[1], [0], [0], [1], [0, 0, 1, 1], [], []>} : vector<8x4xbf16>, vector<4x144xbf16>, vector<8x144xf32> -> vector<8x144xf32>
    %c0_5 = arith.constant 0 : index
    %c0_6 = arith.constant 0 : index
    %c1 = arith.constant 1 : index
    %5 = vector.load %arg1[%c0_5, %c0_6, %c1] : memref<1x4x182xbf16, #tpu.memory_space<vmem>>, vector<1x4x144xbf16>
    %6 = vector.shape_cast %5 : vector<1x4x144xbf16> to vector<4x144xbf16>
    %c1_7 = arith.constant 1 : index
    %c0_8 = arith.constant 0 : index
    %c0_9 = arith.constant 0 : index
    %7 = vector.load %arg2[%c1_7, %c0_8, %c0_9] : memref<9x8x4xbf16, #tpu.memory_space<vmem>>, vector<1x8x4xbf16>
    %8 = vector.shape_cast %7 : vector<1x8x4xbf16> to vector<8x4xbf16>
    %cst_10 = arith.constant dense<0.000000e+00> : vector<8x144xf32>
    %9 = tpu.matmul %8, %6, %cst_10 {dimension_numbers = #tpu.dot_dimension_numbers<[1], [0], [0], [1], [0, 0, 1, 1], [], []>} : vector<8x4xbf16>, vector<4x144xbf16>, vector<8x144xf32> -> vector<8x144xf32>
    %10 = arith.addf %4, %9 : vector<8x144xf32>
    %c0_11 = arith.constant 0 : index
    %c0_12 = arith.constant 0 : index
    %c2 = arith.constant 2 : index
    %11 = vector.load %arg1[%c0_11, %c0_12, %c2] : memref<1x4x182xbf16, #tpu.memory_space<vmem>>, vector<1x4x144xbf16>
    %12 = vector.shape_cast %11 : vector<1x4x144xbf16> to vector<4x144xbf16>
    %c2_13 = arith.constant 2 : index
    %c0_14 = arith.constant 0 : index
    %c0_15 = arith.constant 0 : index
    %13 = vector.load %arg2[%c2_13, %c0_14, %c0_15] : memref<9x8x4xbf16, #tpu.memory_space<vmem>>, vector<1x8x4xbf16>
    %14 = vector.shape_cast %13 : vector<1x8x4xbf16> to vector<8x4xbf16>
    %cst_16 = arith.constant dense<0.000000e+00> : vector<8x144xf32>
    %15 = tpu.matmul %14, %12, %cst_16 {dimension_numbers = #tpu.dot_dimension_numbers<[1], [0], [0], [1], [0, 0, 1, 1], [], []>} : vector<8x4xbf16>, vector<4x144xbf16>, vector<8x144xf32> -> vector<8x144xf32>
    %16 = arith.addf %10, %15 : vector<8x144xf32>
    %c0_17 = arith.constant 0 : index
    %c0_18 = arith.constant 0 : index
    %c18 = arith.constant 18 : index
    %17 = vector.load %arg1[%c0_17, %c0_18, %c18] : memref<1x4x182xbf16, #tpu.memory_space<vmem>>, vector<1x4x144xbf16>
    %18 = vector.shape_cast %17 : vector<1x4x144xbf16> to vector<4x144xbf16>
    %c3 = arith.constant 3 : index
    %c0_19 = arith.constant 0 : index
    %c0_20 = arith.constant 0 : index
    %19 = vector.load %arg2[%c3, %c0_19, %c0_20] : memref<9x8x4xbf16, #tpu.memory_space<vmem>>, vector<1x8x4xbf16>
    %20 = vector.shape_cast %19 : vector<1x8x4xbf16> to vector<8x4xbf16>
    %cst_21 = arith.constant dense<0.000000e+00> : vector<8x144xf32>
    %21 = tpu.matmul %20, %18, %cst_21 {dimension_numbers = #tpu.dot_dimension_numbers<[1], [0], [0], [1], [0, 0, 1, 1], [], []>} : vector<8x4xbf16>, vector<4x144xbf16>, vector<8x144xf32> -> vector<8x144xf32>
    %22 = arith.addf %16, %21 : vector<8x144xf32>
    %c0_22 = arith.constant 0 : index
    %c0_23 = arith.constant 0 : index
    %c19 = arith.constant 19 : index
    %23 = vector.load %arg1[%c0_22, %c0_23, %c19] : memref<1x4x182xbf16, #tpu.memory_space<vmem>>, vector<1x4x144xbf16>
    %24 = vector.shape_cast %23 : vector<1x4x144xbf16> to vector<4x144xbf16>
    %c4 = arith.constant 4 : index
    %c0_24 = arith.constant 0 : index
    %c0_25 = arith.constant 0 : index
    %25 = vector.load %arg2[%c4, %c0_24, %c0_25] : memref<9x8x4xbf16, #tpu.memory_space<vmem>>, vector<1x8x4xbf16>
    %26 = vector.shape_cast %25 : vector<1x8x4xbf16> to vector<8x4xbf16>
    %cst_26 = arith.constant dense<0.000000e+00> : vector<8x144xf32>
    %27 = tpu.matmul %26, %24, %cst_26 {dimension_numbers = #tpu.dot_dimension_numbers<[1], [0], [0], [1], [0, 0, 1, 1], [], []>} : vector<8x4xbf16>, vector<4x144xbf16>, vector<8x144xf32> -> vector<8x144xf32>
    %28 = arith.addf %22, %27 : vector<8x144xf32>
    %c0_27 = arith.constant 0 : index
    %c0_28 = arith.constant 0 : index
    %c20 = arith.constant 20 : index
    %29 = vector.load %arg1[%c0_27, %c0_28, %c20] : memref<1x4x182xbf16, #tpu.memory_space<vmem>>, vector<1x4x144xbf16>
    %30 = vector.shape_cast %29 : vector<1x4x144xbf16> to vector<4x144xbf16>
    %c5 = arith.constant 5 : index
    %c0_29 = arith.constant 0 : index
    %c0_30 = arith.constant 0 : index
    %31 = vector.load %arg2[%c5, %c0_29, %c0_30] : memref<9x8x4xbf16, #tpu.memory_space<vmem>>, vector<1x8x4xbf16>
    %32 = vector.shape_cast %31 : vector<1x8x4xbf16> to vector<8x4xbf16>
    %cst_31 = arith.constant dense<0.000000e+00> : vector<8x144xf32>
    %33 = tpu.matmul %32, %30, %cst_31 {dimension_numbers = #tpu.dot_dimension_numbers<[1], [0], [0], [1], [0, 0, 1, 1], [], []>} : vector<8x4xbf16>, vector<4x144xbf16>, vector<8x144xf32> -> vector<8x144xf32>
    %34 = arith.addf %28, %33 : vector<8x144xf32>
    %c0_32 = arith.constant 0 : index
    %c0_33 = arith.constant 0 : index
    %c36 = arith.constant 36 : index
    %35 = vector.load %arg1[%c0_32, %c0_33, %c36] : memref<1x4x182xbf16, #tpu.memory_space<vmem>>, vector<1x4x144xbf16>
    %36 = vector.shape_cast %35 : vector<1x4x144xbf16> to vector<4x144xbf16>
    %c6 = arith.constant 6 : index
    %c0_34 = arith.constant 0 : index
    %c0_35 = arith.constant 0 : index
    %37 = vector.load %arg2[%c6, %c0_34, %c0_35] : memref<9x8x4xbf16, #tpu.memory_space<vmem>>, vector<1x8x4xbf16>
    %38 = vector.shape_cast %37 : vector<1x8x4xbf16> to vector<8x4xbf16>
    %cst_36 = arith.constant dense<0.000000e+00> : vector<8x144xf32>
    %39 = tpu.matmul %38, %36, %cst_36 {dimension_numbers = #tpu.dot_dimension_numbers<[1], [0], [0], [1], [0, 0, 1, 1], [], []>} : vector<8x4xbf16>, vector<4x144xbf16>, vector<8x144xf32> -> vector<8x144xf32>
    %40 = arith.addf %34, %39 : vector<8x144xf32>
    %c0_37 = arith.constant 0 : index
    %c0_38 = arith.constant 0 : index
    %c37 = arith.constant 37 : index
    %41 = vector.load %arg1[%c0_37, %c0_38, %c37] : memref<1x4x182xbf16, #tpu.memory_space<vmem>>, vector<1x4x144xbf16>
    %42 = vector.shape_cast %41 : vector<1x4x144xbf16> to vector<4x144xbf16>
    %c7 = arith.constant 7 : index
    %c0_39 = arith.constant 0 : index
    %c0_40 = arith.constant 0 : index
    %43 = vector.load %arg2[%c7, %c0_39, %c0_40] : memref<9x8x4xbf16, #tpu.memory_space<vmem>>, vector<1x8x4xbf16>
    %44 = vector.shape_cast %43 : vector<1x8x4xbf16> to vector<8x4xbf16>
    %cst_41 = arith.constant dense<0.000000e+00> : vector<8x144xf32>
    %45 = tpu.matmul %44, %42, %cst_41 {dimension_numbers = #tpu.dot_dimension_numbers<[1], [0], [0], [1], [0, 0, 1, 1], [], []>} : vector<8x4xbf16>, vector<4x144xbf16>, vector<8x144xf32> -> vector<8x144xf32>
    %46 = arith.addf %40, %45 : vector<8x144xf32>
    %c0_42 = arith.constant 0 : index
    %c0_43 = arith.constant 0 : index
    %c38 = arith.constant 38 : index
    %47 = vector.load %arg1[%c0_42, %c0_43, %c38] : memref<1x4x182xbf16, #tpu.memory_space<vmem>>, vector<1x4x144xbf16>
    %48 = vector.shape_cast %47 : vector<1x4x144xbf16> to vector<4x144xbf16>
    %c8 = arith.constant 8 : index
    %c0_44 = arith.constant 0 : index
    %c0_45 = arith.constant 0 : index
    %49 = vector.load %arg2[%c8, %c0_44, %c0_45] : memref<9x8x4xbf16, #tpu.memory_space<vmem>>, vector<1x8x4xbf16>
    %50 = vector.shape_cast %49 : vector<1x8x4xbf16> to vector<8x4xbf16>
    %cst_46 = arith.constant dense<0.000000e+00> : vector<8x144xf32>
    %51 = tpu.matmul %50, %48, %cst_46 {dimension_numbers = #tpu.dot_dimension_numbers<[1], [0], [0], [1], [0, 0, 1, 1], [], []>} : vector<8x4xbf16>, vector<4x144xbf16>, vector<8x144xf32> -> vector<8x144xf32>
    %52 = arith.addf %46, %51 : vector<8x144xf32>
    %53 = tpu.iota {dimensions = array<i32: 1>} : vector<1x144xi32>
    %c18_i32 = arith.constant 18 : i32
    %c0_i32 = arith.constant 0 : i32
    %54 = arith.cmpi eq, %c18_i32, %c0_i32 : i32
    %c1_i32 = arith.constant 1 : i32
    %55 = arith.select %54, %c1_i32, %c18_i32 : i32
    %56 = vector.broadcast %55 : i32 to vector<1x144xi32>
    %57 = arith.remsi %53, %56 : vector<1x144xi32>
    %c0_i32_47 = arith.constant 0 : i32
    %58 = vector.broadcast %c0_i32_47 : i32 to vector<1x144xi32>
    %59 = arith.cmpi ne, %57, %58 : vector<1x144xi32>
    %c0_i32_48 = arith.constant 0 : i32
    %60 = vector.broadcast %c0_i32_48 : i32 to vector<1x144xi32>
    %61 = arith.cmpi slt, %57, %60 : vector<1x144xi32>
    %c0_i32_49 = arith.constant 0 : i32
    %62 = arith.cmpi slt, %55, %c0_i32_49 : i32
    %63 = vector.broadcast %62 : i1 to vector<1x144xi1>
    %64 = vector.broadcast %63 : vector<1x144xi1> to vector<1x144xi1>
    %65 = arith.xori %61, %64 : vector<1x144xi1>
    %66 = arith.andi %65, %59 : vector<1x144xi1>
    %67 = vector.broadcast %55 : i32 to vector<1x144xi32>
    %68 = arith.addi %57, %67 : vector<1x144xi32>
    %69 = arith.select %66, %68, %57 : vector<1x144xi1>, vector<1x144xi32>
    %c16_i32 = arith.constant 16 : i32
    %70 = vector.broadcast %c16_i32 : i32 to vector<1x144xi32>
    %71 = arith.cmpi slt, %69, %70 : vector<1x144xi32>
    %cst_50 = arith.constant 0.000000e+00 : f32
    %72 = vector.shape_cast %71 : vector<1x144xi1> to vector<1x144xi1>
    %73 = vector.broadcast %72 : vector<1x144xi1> to vector<8x144xi1>
    %74 = vector.broadcast %cst_50 : f32 to vector<8x144xf32>
    %75 = arith.select %73, %52, %74 : vector<8x144xi1>, vector<8x144xf32>
    %cst_51 = arith.constant dense<0.000000e+00> : vector<8xf32>
    %76 = vector.multi_reduction <add>, %75, %cst_51 [1] : vector<8x144xf32> to vector<8xf32>
    %77 = vector.shape_cast %76 : vector<8xf32> to vector<8x1xf32>
    %c0_52 = arith.constant 0 : index
    %c0_53 = arith.constant 0 : index
    %c0_54 = arith.constant 0 : index
    %78 = vector.load %arg3[%c0_52, %c0_53, %c0_54] : memref<1x8x2xf32, #tpu.memory_space<vmem>>, vector<1x8x1xf32>
    %79 = vector.shape_cast %78 : vector<1x8x1xf32> to vector<8x1xf32>
    %80 = vector.shape_cast %77 : vector<8x1xf32> to vector<1x8x1xf32>
    tpu.vector_store %arg3[%c0_52, %c0_53, %c0_54], %80 {strides = array<i32>} : memref<1x8x2xf32, #tpu.memory_space<vmem>>, vector<1x8x1xf32>,
    %81 = arith.mulf %75, %75 : vector<8x144xf32>
    %cst_55 = arith.constant dense<0.000000e+00> : vector<8xf32>
    %82 = vector.multi_reduction <add>, %81, %cst_55 [1] : vector<8x144xf32> to vector<8xf32>
    %83 = vector.shape_cast %82 : vector<8xf32> to vector<8x1xf32>
    %c0_56 = arith.constant 0 : index
    %c0_57 = arith.constant 0 : index
    %c1_58 = arith.constant 1 : index
    %84 = vector.load %arg3[%c0_56, %c0_57, %c1_58] : memref<1x8x2xf32, #tpu.memory_space<vmem>>, vector<1x8x1xf32>
    %85 = vector.shape_cast %84 : vector<1x8x1xf32> to vector<8x1xf32>
    %86 = vector.shape_cast %83 : vector<8x1xf32> to vector<1x8x1xf32>
    tpu.vector_store %arg3[%c0_56, %c0_57, %c1_58], %86 {strides = array<i32>} : memref<1x8x2xf32, #tpu.memory_space<vmem>>, vector<1x8x1xf32>,
    return
  }
  func.func @transform_0(%arg0: i32) -> (i32, i32, i32) {
    %c0_i32 = arith.constant 0 : i32
    %c0_i32_0 = arith.constant 0 : i32
    %c0_i32_1 = arith.constant 0 : i32
    return %arg0, %c0_i32, %c0_i32_0 : i32, i32, i32
  }
  func.func @transform_1(%arg0: i32) -> (i32, i32, i32) {
    %c0_i32 = arith.constant 0 : i32
    %c0_i32_0 = arith.constant 0 : i32
    %c0_i32_1 = arith.constant 0 : i32
    %c0_i32_2 = arith.constant 0 : i32
    return %c0_i32, %c0_i32_0, %c0_i32_1 : i32, i32, i32
  }
  func.func @transform_2(%arg0: i32) -> (i32, i32, i32) {
    %c0_i32 = arith.constant 0 : i32
    %c0_i32_0 = arith.constant 0 : i32
    %c0_i32_1 = arith.constant 0 : i32
    return %arg0, %c0_i32, %c0_i32_0 : i32, i32, i32
  }
}

</mosaic_0001>

<llo_original>
// kernel: tpu_custom_call.1
$region0: #{tpu_custom_call.1}
  #allocation0 [shape = 'u32[]', space=smem, size = 0x4, offset = 0x4, fixed_abs, tag = 'smem constant byte address 0x4 - core index']
  #allocation1 [shape = 'u32[144,128]{1,0:T(1,128)}', space=vmem, size = 0x12000, scoped, tag = 'internal scratch']
  %s0 = inlined_call_operand.vmem [shape: bf16[4,4,182], index: 0, kind: input, shape index: {}]
  %s1 = inlined_call_operand.vmem [shape: bf16[9,8,4], index: 1, kind: input, shape index: {}]
  %s2 = inlined_call_operand.vmem [shape: f32[4,8,2], index: 2, kind: output, shape index: {}]
  %s3 = sld [smem:[#allocation0]]
  $region41: #{tpu_custom_call.1} parent=0
    _
  %s5 = ssub.s32 1, %s3
  %s6 = scalar_select 0, %s5, %s3
  loop: start=0, step=1, limit=6
  $region2: #{tpu_custom_call.1} parent=0 // loop_pre_header
    _
  $region3: #{tpu_custom_call.1} parent=0 // loop_header
    %s8 = sphi 0, %s12
    %p9 = scmp.ge.s32.totalorder %s8, 6
    %s18 = sphi 0, %s20
    %s21 = sphi 0, %s18
    %s22 = sphi 0, %s21
    %s38 = sphi 0, %s22
    %s42 = sphi 0, %s42
    %s44 = sphi 0, %s42
    %s45 = sphi 0, %s44
    %s59 = sphi 0, %s45
    %s65 = sphi 0, %s67
    %s68 = sphi 0, %s65
    %s69 = sphi 0, %s68
    %s85 = sphi 0, %s69
  $region4: #{tpu_custom_call.1} parent=0 // loop_header_branch
    %11 = sbr.rel (%p9) target = $region8
  $region5: #{tpu_custom_call.1} parent=0 // loop_body
    %s13 = ssub.s32 %s8, 1
    %s14 = ssub.s32 %s8, 2
    %s15 = sadd.s32 %s8, 1
    %s16 = ssub.s32 %s8, %s15
    %p17 = scmp.eq.s32.totalorder %s16, 0
    %s19 = sadd.s32 %s18, 1
    %s20 = scalar_select %p17, %s18, %s19
    %p23 = pneg %p17
    %p24 = scmp.eq.s32.totalorder %s8, 3
    %p25 = por %p23, %p24
    %p26 = scmp.ne.s32.totalorder %s18, %s21
    %p27 = scmp.eq.s32.totalorder %s8, 0
    %p28 = por %p26, %p27
    %p29 = scmp.ne.s32.totalorder %s18, %s21
    %p30 = scmp.eq.s32.totalorder %s13, 3
    %p31 = por %p29, %p30
    %p32 = scmp.ne.s32.totalorder %s21, %s22
    %p33 = scmp.eq.s32.totalorder %s13, 0
    %p34 = por %p32, %p33
    %p35 = scmp.ne.s32.totalorder %s21, %s22
    %p36 = scmp.eq.s32.totalorder %s14, 3
    %p37 = por %p35, %p36
    %p39 = scmp.ne.s32.totalorder %s22, %s38
    %p40 = scmp.eq.s32.totalorder %s14, 0
    %p41 = por %p39, %p40
    %s43 = sadd.s32 %s42, 1
    %p46 = scmp.eq.s32.totalorder %s8, 3
    %p47 = scmp.ne.s32.totalorder %s42, %s44
    %p48 = scmp.eq.s32.totalorder %s8, 0
    %p49 = por %p47, %p48
    %p50 = scmp.ne.s32.totalorder %s42, %s44
    %p51 = scmp.eq.s32.totalorder %s13, 3
    %p52 = por %p50, %p51
    %p53 = scmp.ne.s32.totalorder %s44, %s45
    %p54 = scmp.eq.s32.totalorder %s13, 0
    %p55 = por %p53, %p54
    %p56 = scmp.ne.s32.totalorder %s44, %s45
    %p57 = scmp.eq.s32.totalorder %s14, 3
    %p58 = por %p56, %p57
    %p60 = scmp.ne.s32.totalorder %s45, %s59
    %p61 = scmp.eq.s32.totalorder %s14, 0
    %p62 = por %p60, %p61
    %s63 = ssub.s32 %s8, %s15
    %p64 = scmp.eq.s32.totalorder %s63, 0
    %s66 = sadd.s32 %s65, 1
    %s67 = scalar_select %p64, %s65, %s66
    %p70 = pneg %p64
    %p71 = scmp.eq.s32.totalorder %s8, 3
    %p72 = por %p70, %p71
    %p73 = scmp.ne.s32.totalorder %s65, %s68
    %p74 = scmp.eq.s32.totalorder %s8, 0
    %p75 = por %p73, %p74
    %p76 = scmp.ne.s32.totalorder %s65, %s68
    %p77 = scmp.eq.s32.totalorder %s13, 3
    %p78 = por %p76, %p77
    %p79 = scmp.ne.s32.totalorder %s68, %s69
    %p80 = scmp.eq.s32.totalorder %s13, 0
    %p81 = por %p79, %p80
    %p82 = scmp.ne.s32.totalorder %s68, %s69
    %p83 = scmp.eq.s32.totalorder %s14, 3
    %p84 = por %p82, %p83
    %p86 = scmp.ne.s32.totalorder %s69, %s85
    %p87 = scmp.eq.s32.totalorder %s14, 0
    %p88 = por %p86, %p87
    %p89 = scmp.le.s32.totalorder 1, %s8
    %p90 = scmp.lt.s32.totalorder %s8, 5
    %p91 = pnand %p89, %p90
    %p92 = pneg %p91
    // Predicated region
    $region9: #{tpu_custom_call.1} parent=5 // pred_check
      _
    $region10: #{tpu_custom_call.1} parent=5 // pred_check_branch
      %94 = sbr.rel (%p91) target = $region12
    $region11: #{tpu_custom_call.1} parent=5 // pred_region
      %s95 = ssub.s32 %s8, 1
      // Predicated region
      $region13: #{tpu_custom_call.1} parent=11 // pred_check
        %p96 = pneg %p55
      $region14: #{tpu_custom_call.1} parent=11 // pred_check_branch
        %98 = sbr.rel (%p96) target = $region16
      $region15: #{tpu_custom_call.1} parent=11 // pred_region
        _
      $region16: #{tpu_custom_call.1} parent=11 // pred_fallthru
        _
    $region12: #{tpu_custom_call.1} parent=5 // pred_fallthru
      _
    %p99 = scmp.lt.s32.totalorder %s8, 4
    // Predicated region
    $region17: #{tpu_custom_call.1} parent=5 // pred_check
      %p100 = pneg %p99
    $region18: #{tpu_custom_call.1} parent=5 // pred_check_branch
      %102 = sbr.rel (%p100) target = $region20
    $region19: #{tpu_custom_call.1} parent=5 // pred_region
      // Predicated region
      $region21: #{tpu_custom_call.1} parent=19 // pred_check
        %p103 = pneg %p28
      $region22: #{tpu_custom_call.1} parent=19 // pred_check_branch
        %105 = sbr.rel (%p103) target = $region24
      $region23: #{tpu_custom_call.1} parent=19 // pred_region
        %p106 = scmp.lt.s32.totalorder %s8, 3
        %s107 = scalar_select %p106, %s8, 3
        %s108 = smul.addr %s107, 2
        %s109 = smul.addr %s108, 2
        %s110 = scalar_lea.vmem %s0, %s109
      $region24: #{tpu_custom_call.1} parent=19 // pred_fallthru
        _
    $region20: #{tpu_custom_call.1} parent=5 // pred_fallthru
      _
    %p111 = scmp.le.s32.totalorder 1, %s8
    %p112 = scmp.lt.s32.totalorder %s8, 5
    %p113 = pnand %p111, %p112
    %p114 = pneg %p113
    // Predicated region
    $region25: #{tpu_custom_call.1} parent=5 // pred_check
      _
    $region26: #{tpu_custom_call.1} parent=5 // pred_check_branch
      %116 = sbr.rel (%p113) target = $region28
    $region27: #{tpu_custom_call.1} parent=5 // pred_region
      %s117 = ssub.s32 %s8, 1
      %p118 = scmp.lt.s32.totalorder %s13, 3
      %s119 = scalar_select %p118, %s13, 3
      %s120 = smul.addr %s119, 2
      %s121 = smul.addr %s120, 2
      %s122 = scalar_lea.vmem %s0, %s121
      %p123 = pneg %p34
      %p124 = pneg %p31
      %p125 = pneg %p55
      %p126 = pneg %p52
      %p127 = pneg %p81
      %p128 = pneg %p78
      %p129 = scmp.lt.s32.totalorder %s13, 3
      %s130 = scalar_select %p129, %s13, 3
      %s131 = smul.addr %s130, 8
      %s132 = scalar_lea.vmem %s2, %s131
      %p133 = scmp.lt.s32.totalorder %s13, 3
      %s134 = scalar_select %p133, %s13, 3
      %s135 = smul.addr %s134, 2
      %s136 = smul.addr %s135, 2
      %s137 = scalar_lea.vmem %s0, %s136
      %p138 = scmp.lt.s32.totalorder %s13, 3
      %s139 = scalar_select %p138, %s13, 3
      %s140 = smul.addr %s139, 8
      %s141 = scalar_lea.vmem %s2, %s140
      %v143 = vld [vmem:[%s137] sm:$0xf]
      %v144 = vld [vmem:[%s1] sm:$0xf]
      %s145 = scalar_lea.vmem %s1, 4
      %v146 = vld [vmem:[%s145] sm:$0xf]
      %v149 = vunpack.c.l.s4 1983009808
      %v150 = vunpack.c.0.s8 %v149
      %v151 = vlaneseq
      %v152 = vshrl.u32 %v151, 7
      %v153 = vsub.s32 %v150, %v152
      %v154 = vrot.slane %v143, %v153
      %v155 = vcombine.high %v154, %v154
      %156 = vrot.lane.b32.xlu0 %v154, 127
      %v157 = vpop.permute.xlu0 %156
      %158 = vrot.lane.b32.xlu0 %v155, 127
      %v159 = vpop.permute.xlu0 %158
      %vm160 = vcmask 1039360
      %v161 = vsel %vm160, %v157, %v159
      %vm162 = vcmask 31744
      %v164 = vsel %vm162, %v146, 0
      %vm166 = vcmask 1041408
      %v168 = vsel %vm166, %v161, 0
      %v171 = vsel %vm166, %v159, 0
      %173 = vmatprep.subr.bf16.mxu0 0
      %174 = vmatpush1.bf16.msra.mxu0 0
      %175 = vmatprep.subr.bf16.mxu0 0
      %176 = vmatpush1.bf16.msra.mxu0 0
      %177 = vmatprep.subr.bf16.mxu0 0
      %178 = vmatpush1.bf16.msra.mxu0 0
      %179 = vmatprep.subr.bf16.mxu0 0
      %180 = vmatpush1.bf16.msra.mxu0 0
      %181 = vmatprep.subr.bf16.mxu0 0
      %182 = vmatpush1.bf16.msra.mxu0 0
      %183 = vmatprep.subr.bf16.mxu0 0
      %184 = vmatpush1.bf16.msra.mxu0 0
      %185 = vmatprep.subr.bf16.mxu0 0
      %186 = vmatpush1.bf16.msra.mxu0 0
      %187 = vmatprep.subr.bf16.mxu0 %v171
      %188 = vmatpush1.bf16.msra.mxu0 %v168
      %189 = vmatprep.subr.bf16.mxu0 0
      %190 = vmatpush2.bf16.msra.mxu0 0
      %191 = vmatprep.subr.bf16.mxu0 0
      %192 = vmatpush2.bf16.msra.mxu0 0
      %193 = vmatprep.subr.bf16.mxu0 0
      %194 = vmatpush2.bf16.msra.mxu0 0
      %195 = vmatprep.subr.bf16.mxu0 0
      %196 = vmatpush2.bf16.msra.mxu0 0
      %197 = vmatprep.subr.bf16.mxu0 0
      %198 = vmatpush2.bf16.msra.mxu0 0
      %199 = vmatprep.subr.bf16.mxu0 0
      %200 = vmatpush2.bf16.msra.mxu0 0
      %201 = vmatprep.subr.bf16.mxu0 0
      %202 = vmatpush2.bf16.msra.mxu0 0
      %203 = vmatprep.subr.bf16.mxu0 0
      %204 = vmatpush2.bf16.msra.mxu0 0
      %205 = vmatprep.mubr.bf16.mxu0 0
      %206 = vmatmul.mubr.bf16.gmra.mxu0 %v164
      %v207 = vpop.f32.mrf.mxu0
      %v208 = vadd.f32 0.0, %v207
      %v209 = vpop.f32.mrf.mxu0
      %v210 = vadd.f32 0.0, %v209
      %v211 = vpop.f32.mrf.mxu0
      %v212 = vpop.f32.mrf.mxu0
      %213 = vdwg.mxu0
      %v215 = vsel %vm162, %v144, 0
      %v218 = vsel %vm166, %v154, 0
      %v221 = vsel %vm166, %v155, 0
      %223 = vmatprep.subr.bf16.mxu0 0
      %224 = vmatpush1.bf16.msra.mxu0 0
      %225 = vmatprep.subr.bf16.mxu0 0
      %226 = vmatpush1.bf16.msra.mxu0 0
      %227 = vmatprep.subr.bf16.mxu0 0
      %228 = vmatpush1.bf16.msra.mxu0 0
      %229 = vmatprep.subr.bf16.mxu0 0
      %230 = vmatpush1.bf16.msra.mxu0 0
      %231 = vmatprep.subr.bf16.mxu0 0
      %232 = vmatpush1.bf16.msra.mxu0 0
      %233 = vmatprep.subr.bf16.mxu0 0
      %234 = vmatpush1.bf16.msra.mxu0 0
      %235 = vmatprep.subr.bf16.mxu0 0
      %236 = vmatpush1.bf16.msra.mxu0 0
      %237 = vmatprep.subr.bf16.mxu0 %v221
      %238 = vmatpush1.bf16.msra.mxu0 %v218
      %239 = vmatprep.subr.bf16.mxu0 0
      %240 = vmatpush2.bf16.msra.mxu0 0
      %241 = vmatprep.subr.bf16.mxu0 0
      %242 = vmatpush2.bf16.msra.mxu0 0
      %243 = vmatprep.subr.bf16.mxu0 0
      %244 = vmatpush2.bf16.msra.mxu0 0
      %245 = vmatprep.subr.bf16.mxu0 0
      %246 = vmatpush2.bf16.msra.mxu0 0
      %247 = vmatprep.subr.bf16.mxu0 0
      %248 = vmatpush2.bf16.msra.mxu0 0
      %249 = vmatprep.subr.bf16.mxu0 0
      %250 = vmatpush2.bf16.msra.mxu0 0
      %251 = vmatprep.subr.bf16.mxu0 0
      %252 = vmatpush2.bf16.msra.mxu0 0
      %253 = vmatprep.subr.bf16.mxu0 0
      %254 = vmatpush2.bf16.msra.mxu0 0
      %255 = vmatprep.mubr.bf16.mxu0 0
      %256 = vmatmul.mubr.bf16.gmra.mxu0 %v215
      %v257 = vpop.f32.mrf.mxu0
      %v258 = vadd.f32 %v208, %v257
      %v259 = vpop.f32.mrf.mxu0
      %v260 = vadd.f32 %v210, %v259
      %v261 = vpop.f32.mrf.mxu0
      %v262 = vpop.f32.mrf.mxu0
      %263 = vdwg.mxu0
      %v264 = vld [vmem:[%s137] sm:$0xf]
      %s265 = scalar_lea.vmem %s1, 8
      %v266 = vld [vmem:[%s265] sm:$0xf]
      %v269 = vunpack.c.l.s4 1983009808
      %v270 = vunpack.c.0.s8 %v269
      %v271 = vlaneseq
      %v272 = vshrl.u32 %v271, 7
      %v273 = vsub.s32 %v270, %v272
      %v274 = vrot.slane %v264, %v273
      %v275 = vcombine.high %v274, %v274
      %276 = vrot.lane.b32.xlu0 %v274, 126
      %v277 = vpop.permute.xlu0 %276
      %278 = vrot.lane.b32.xlu0 %v275, 126
      %v279 = vpop.permute.xlu0 %278
      %vm280 = vcmask 1031168
      %v281 = vsel %vm280, %v277, %v279
      %v283 = vsel %vm162, %v266, 0
      %v286 = vsel %vm166, %v281, 0
      %v289 = vsel %vm166, %v279, 0
      %291 = vmatprep.subr.bf16.mxu0 0
      %292 = vmatpush1.bf16.msra.mxu0 0
      %293 = vmatprep.subr.bf16.mxu0 0
      %294 = vmatpush1.bf16.msra.mxu0 0
      %295 = vmatprep.subr.bf16.mxu0 0
      %296 = vmatpush1.bf16.msra.mxu0 0
      %297 = vmatprep.subr.bf16.mxu0 0
      %298 = vmatpush1.bf16.msra.mxu0 0
      %299 = vmatprep.subr.bf16.mxu0 0
      %300 = vmatpush1.bf16.msra.mxu0 0
      %301 = vmatprep.subr.bf16.mxu0 0
      %302 = vmatpush1.bf16.msra.mxu0 0
      %303 = vmatprep.subr.bf16.mxu0 0
      %304 = vmatpush1.bf16.msra.mxu0 0
      %305 = vmatprep.subr.bf16.mxu0 %v289
      %306 = vmatpush1.bf16.msra.mxu0 %v286
      %307 = vmatprep.subr.bf16.mxu0 0
      %308 = vmatpush2.bf16.msra.mxu0 0
      %309 = vmatprep.subr.bf16.mxu0 0
      %310 = vmatpush2.bf16.msra.mxu0 0
      %311 = vmatprep.subr.bf16.mxu0 0
      %312 = vmatpush2.bf16.msra.mxu0 0
      %313 = vmatprep.subr.bf16.mxu0 0
      %314 = vmatpush2.bf16.msra.mxu0 0
      %315 = vmatprep.subr.bf16.mxu0 0
      %316 = vmatpush2.bf16.msra.mxu0 0
      %317 = vmatprep.subr.bf16.mxu0 0
      %318 = vmatpush2.bf16.msra.mxu0 0
      %319 = vmatprep.subr.bf16.mxu0 0
      %320 = vmatpush2.bf16.msra.mxu0 0
      %321 = vmatprep.subr.bf16.mxu0 0
      %322 = vmatpush2.bf16.msra.mxu0 0
      %323 = vmatprep.mubr.bf16.mxu0 0
      %324 = vmatmul.mubr.bf16.gmra.mxu0 %v283
      %v325 = vpop.f32.mrf.mxu0
      %v326 = vadd.f32 0.0, %v325
      %v327 = vpop.f32.mrf.mxu0
      %v328 = vadd.f32 0.0, %v327
      %v329 = vpop.f32.mrf.mxu0
      %v330 = vpop.f32.mrf.mxu0
      %331 = vdwg.mxu0
      %v332 = vadd.f32 %v258, %v326
      %v333 = vadd.f32 %v260, %v328
      %v334 = vld [vmem:[%s137] sm:$0xf]
      %s335 = scalar_lea.vmem %s1, 12
      %v336 = vld [vmem:[%s335] sm:$0xf]
      %v339 = vunpack.c.l.s4 1983009808
      %v340 = vunpack.c.0.s8 %v339
      %v341 = vlaneseq
      %v342 = vshrl.u32 %v341, 7
      %v343 = vsub.s32 %v340, %v342
      %v344 = vrot.slane %v334, %v343
      %v345 = vcombine.high %v344, %v344
      %346 = vrot.lane.b32.xlu0 %v344, 110
      %v347 = vpop.permute.xlu0 %346
      %348 = vrot.lane.b32.xlu0 %v345, 110
      %v349 = vpop.permute.xlu0 %348
      %vm350 = vcmask 900096
      %v351 = vsel %vm350, %v347, %v349
      %v353 = vsel %vm162, %v336, 0
      %v356 = vsel %vm166, %v351, 0
      %v359 = vsel %vm166, %v349, 0
      %361 = vmatprep.subr.bf16.mxu0 0
      %362 = vmatpush1.bf16.msra.mxu0 0
      %363 = vmatprep.subr.bf16.mxu0 0
      %364 = vmatpush1.bf16.msra.mxu0 0
      %365 = vmatprep.subr.bf16.mxu0 0
      %366 = vmatpush1.bf16.msra.mxu0 0
      %367 = vmatprep.subr.bf16.mxu0 0
      %368 = vmatpush1.bf16.msra.mxu0 0
      %369 = vmatprep.subr.bf16.mxu0 0
      %370 = vmatpush1.bf16.msra.mxu0 0
      %371 = vmatprep.subr.bf16.mxu0 0
      %372 = vmatpush1.bf16.msra.mxu0 0
      %373 = vmatprep.subr.bf16.mxu0 0
      %374 = vmatpush1.bf16.msra.mxu0 0
      %375 = vmatprep.subr.bf16.mxu0 %v359
      %376 = vmatpush1.bf16.msra.mxu0 %v356
      %377 = vmatprep.subr.bf16.mxu0 0
      %378 = vmatpush2.bf16.msra.mxu0 0
      %379 = vmatprep.subr.bf16.mxu0 0
      %380 = vmatpush2.bf16.msra.mxu0 0
      %381 = vmatprep.subr.bf16.mxu0 0
      %382 = vmatpush2.bf16.msra.mxu0 0
      %383 = vmatprep.subr.bf16.mxu0 0
      %384 = vmatpush2.bf16.msra.mxu0 0
      %385 = vmatprep.subr.bf16.mxu0 0
      %386 = vmatpush2.bf16.msra.mxu0 0
      %387 = vmatprep.subr.bf16.mxu0 0
      %388 = vmatpush2.bf16.msra.mxu0 0
      %389 = vmatprep.subr.bf16.mxu0 0
      %390 = vmatpush2.bf16.msra.mxu0 0
      %391 = vmatprep.subr.bf16.mxu0 0
      %392 = vmatpush2.bf16.msra.mxu0 0
      %393 = vmatprep.mubr.bf16.mxu0 0
      %394 = vmatmul.mubr.bf16.gmra.mxu0 %v353
      %v395 = vpop.f32.mrf.mxu0
      %v396 = vadd.f32 0.0, %v395
      %v397 = vpop.f32.mrf.mxu0
      %v398 = vadd.f32 0.0, %v397
      %v399 = vpop.f32.mrf.mxu0
      %v400 = vpop.f32.mrf.mxu0
      %401 = vdwg.mxu0
      %v402 = vadd.f32 %v332, %v396
      %v403 = vadd.f32 %v333, %v398
      %v404 = vld [vmem:[%s137] sm:$0xf]
      %s405 = scalar_lea.vmem %s1, 16
      %v406 = vld [vmem:[%s405] sm:$0xf]
      %v409 = vunpack.c.l.s4 1983009808
      %v410 = vunpack.c.0.s8 %v409
      %v411 = vlaneseq
      %v412 = vshrl.u32 %v411, 7
      %v413 = vsub.s32 %v410, %v412
      %v414 = vrot.slane %v404, %v413
      %v415 = vcombine.high %v414, %v414
      %416 = vrot.lane.b32.xlu0 %v414, 109
      %v417 = vpop.permute.xlu0 %416
      %418 = vrot.lane.b32.xlu0 %v415, 109
      %v419 = vpop.permute.xlu0 %418
      %vm420 = vcmask 891904
      %v421 = vsel %vm420, %v417, %v419
      %v423 = vsel %vm162, %v406, 0
      %v426 = vsel %vm166, %v421, 0
      %v429 = vsel %vm166, %v419, 0
      %431 = vmatprep.subr.bf16.mxu0 0
      %432 = vmatpush1.bf16.msra.mxu0 0
      %433 = vmatprep.subr.bf16.mxu0 0
      %434 = vmatpush1.bf16.msra.mxu0 0
      %435 = vmatprep.subr.bf16.mxu0 0
      %436 = vmatpush1.bf16.msra.mxu0 0
      %437 = vmatprep.subr.bf16.mxu0 0
      %438 = vmatpush1.bf16.msra.mxu0 0
      %439 = vmatprep.subr.bf16.mxu0 0
      %440 = vmatpush1.bf16.msra.mxu0 0
      %441 = vmatprep.subr.bf16.mxu0 0
      %442 = vmatpush1.bf16.msra.mxu0 0
      %443 = vmatprep.subr.bf16.mxu0 0
      %444 = vmatpush1.bf16.msra.mxu0 0
      %445 = vmatprep.subr.bf16.mxu0 %v429
      %446 = vmatpush1.bf16.msra.mxu0 %v426
      %447 = vmatprep.subr.bf16.mxu0 0
      %448 = vmatpush2.bf16.msra.mxu0 0
      %449 = vmatprep.subr.bf16.mxu0 0
      %450 = vmatpush2.bf16.msra.mxu0 0
      %451 = vmatprep.subr.bf16.mxu0 0
      %452 = vmatpush2.bf16.msra.mxu0 0
      %453 = vmatprep.subr.bf16.mxu0 0
      %454 = vmatpush2.bf16.msra.mxu0 0
      %455 = vmatprep.subr.bf16.mxu0 0
      %456 = vmatpush2.bf16.msra.mxu0 0
      %457 = vmatprep.subr.bf16.mxu0 0
      %458 = vmatpush2.bf16.msra.mxu0 0
      %459 = vmatprep.subr.bf16.mxu0 0
      %460 = vmatpush2.bf16.msra.mxu0 0
      %461 = vmatprep.subr.bf16.mxu0 0
      %462 = vmatpush2.bf16.msra.mxu0 0
      %463 = vmatprep.mubr.bf16.mxu0 0
      %464 = vmatmul.mubr.bf16.gmra.mxu0 %v423
      %v465 = vpop.f32.mrf.mxu0
      %v466 = vadd.f32 0.0, %v465
      %v467 = vpop.f32.mrf.mxu0
      %v468 = vadd.f32 0.0, %v467
      %v469 = vpop.f32.mrf.mxu0
      %v470 = vpop.f32.mrf.mxu0
      %471 = vdwg.mxu0
      %v472 = vadd.f32 %v402, %v466
      %v473 = vadd.f32 %v403, %v468
      %v474 = vld [vmem:[%s137] sm:$0xf]
      %s475 = scalar_lea.vmem %s1, 20
      %v476 = vld [vmem:[%s475] sm:$0xf]
      %v479 = vunpack.c.l.s4 1983009808
      %v480 = vunpack.c.0.s8 %v479
      %v481 = vlaneseq
      %v482 = vshrl.u32 %v481, 7
      %v483 = vsub.s32 %v480, %v482
      %v484 = vrot.slane %v474, %v483
      %v485 = vcombine.high %v484, %v484
      %486 = vrot.lane.b32.xlu0 %v484, 108
      %v487 = vpop.permute.xlu0 %486
      %488 = vrot.lane.b32.xlu0 %v485, 108
      %v489 = vpop.permute.xlu0 %488
      %vm490 = vcmask 883712
      %v491 = vsel %vm490, %v487, %v489
      %v493 = vsel %vm162, %v476, 0
      %v496 = vsel %vm166, %v491, 0
      %v499 = vsel %vm166, %v489, 0
      %501 = vmatprep.subr.bf16.mxu0 0
      %502 = vmatpush1.bf16.msra.mxu0 0
      %503 = vmatprep.subr.bf16.mxu0 0
      %504 = vmatpush1.bf16.msra.mxu0 0
      %505 = vmatprep.subr.bf16.mxu0 0
      %506 = vmatpush1.bf16.msra.mxu0 0
      %507 = vmatprep.subr.bf16.mxu0 0
      %508 = vmatpush1.bf16.msra.mxu0 0
      %509 = vmatprep.subr.bf16.mxu0 0
      %510 = vmatpush1.bf16.msra.mxu0 0
      %511 = vmatprep.subr.bf16.mxu0 0
      %512 = vmatpush1.bf16.msra.mxu0 0
      %513 = vmatprep.subr.bf16.mxu0 0
      %514 = vmatpush1.bf16.msra.mxu0 0
      %515 = vmatprep.subr.bf16.mxu0 %v499
      %516 = vmatpush1.bf16.msra.mxu0 %v496
      %517 = vmatprep.subr.bf16.mxu0 0
      %518 = vmatpush2.bf16.msra.mxu0 0
      %519 = vmatprep.subr.bf16.mxu0 0
      %520 = vmatpush2.bf16.msra.mxu0 0
      %521 = vmatprep.subr.bf16.mxu0 0
      %522 = vmatpush2.bf16.msra.mxu0 0
      %523 = vmatprep.subr.bf16.mxu0 0
      %524 = vmatpush2.bf16.msra.mxu0 0
      %525 = vmatprep.subr.bf16.mxu0 0
      %526 = vmatpush2.bf16.msra.mxu0 0
      %527 = vmatprep.subr.bf16.mxu0 0
      %528 = vmatpush2.bf16.msra.mxu0 0
      %529 = vmatprep.subr.bf16.mxu0 0
      %530 = vmatpush2.bf16.msra.mxu0 0
      %531 = vmatprep.subr.bf16.mxu0 0
      %532 = vmatpush2.bf16.msra.mxu0 0
      %533 = vmatprep.mubr.bf16.mxu0 0
      %534 = vmatmul.mubr.bf16.gmra.mxu0 %v493
      %v535 = vpop.f32.mrf.mxu0
      %v536 = vadd.f32 0.0, %v535
      %v537 = vpop.f32.mrf.mxu0
      %v538 = vadd.f32 0.0, %v537
      %v539 = vpop.f32.mrf.mxu0
      %v540 = vpop.f32.mrf.mxu0
      %541 = vdwg.mxu0
      %v542 = vadd.f32 %v472, %v536
      %v543 = vadd.f32 %v473, %v538
      %v544 = vld [vmem:[%s137] sm:$0xf]
      %s545 = scalar_lea.vmem %s1, 24
      %v546 = vld [vmem:[%s545] sm:$0xf]
      %v549 = vunpack.c.l.s4 1983009808
      %v550 = vunpack.c.0.s8 %v549
      %v551 = vlaneseq
      %v552 = vshrl.u32 %v551, 7
      %v553 = vsub.s32 %v550, %v552
      %v554 = vrot.slane %v544, %v553
      %v555 = vcombine.high %v554, %v554
      %556 = vrot.lane.b32.xlu0 %v554, 92
      %v557 = vpop.permute.xlu0 %556
      %558 = vrot.lane.b32.xlu0 %v555, 92
      %v559 = vpop.permute.xlu0 %558
      %vm560 = vcmask 752640
      %v561 = vsel %vm560, %v557, %v559
      %v563 = vsel %vm162, %v546, 0
      %v566 = vsel %vm166, %v561, 0
      %v569 = vsel %vm166, %v559, 0
      %571 = vmatprep.subr.bf16.mxu0 0
      %572 = vmatpush1.bf16.msra.mxu0 0
      %573 = vmatprep.subr.bf16.mxu0 0
      %574 = vmatpush1.bf16.msra.mxu0 0
      %575 = vmatprep.subr.bf16.mxu0 0
      %576 = vmatpush1.bf16.msra.mxu0 0
      %577 = vmatprep.subr.bf16.mxu0 0
      %578 = vmatpush1.bf16.msra.mxu0 0
      %579 = vmatprep.subr.bf16.mxu0 0
      %580 = vmatpush1.bf16.msra.mxu0 0
      %581 = vmatprep.subr.bf16.mxu0 0
      %582 = vmatpush1.bf16.msra.mxu0 0
      %583 = vmatprep.subr.bf16.mxu0 0
      %584 = vmatpush1.bf16.msra.mxu0 0
      %585 = vmatprep.subr.bf16.mxu0 %v569
      %586 = vmatpush1.bf16.msra.mxu0 %v566
      %587 = vmatprep.subr.bf16.mxu0 0
      %588 = vmatpush2.bf16.msra.mxu0 0
      %589 = vmatprep.subr.bf16.mxu0 0
      %590 = vmatpush2.bf16.msra.mxu0 0
      %591 = vmatprep.subr.bf16.mxu0 0
      %592 = vmatpush2.bf16.msra.mxu0 0
      %593 = vmatprep.subr.bf16.mxu0 0
      %594 = vmatpush2.bf16.msra.mxu0 0
      %595 = vmatprep.subr.bf16.mxu0 0
      %596 = vmatpush2.bf16.msra.mxu0 0
      %597 = vmatprep.subr.bf16.mxu0 0
      %598 = vmatpush2.bf16.msra.mxu0 0
      %599 = vmatprep.subr.bf16.mxu0 0
      %600 = vmatpush2.bf16.msra.mxu0 0
      %601 = vmatprep.subr.bf16.mxu0 0
      %602 = vmatpush2.bf16.msra.mxu0 0
      %603 = vmatprep.mubr.bf16.mxu0 0
      %604 = vmatmul.mubr.bf16.gmra.mxu0 %v563
      %v605 = vpop.f32.mrf.mxu0
      %v606 = vadd.f32 0.0, %v605
      %v607 = vpop.f32.mrf.mxu0
      %v608 = vadd.f32 0.0, %v607
      %v609 = vpop.f32.mrf.mxu0
      %v610 = vpop.f32.mrf.mxu0
      %611 = vdwg.mxu0
      %v612 = vadd.f32 %v542, %v606
      %v613 = vadd.f32 %v543, %v608
      %v614 = vld [vmem:[%s137] sm:$0xf]
      %s615 = scalar_lea.vmem %s1, 28
      %v616 = vld [vmem:[%s615] sm:$0xf]
      %v619 = vunpack.c.l.s4 1983009808
      %v620 = vunpack.c.0.s8 %v619
      %v621 = vlaneseq
      %v622 = vshrl.u32 %v621, 7
      %v623 = vsub.s32 %v620, %v622
      %v624 = vrot.slane %v614, %v623
      %v625 = vcombine.high %v624, %v624
      %626 = vrot.lane.b32.xlu0 %v624, 91
      %v627 = vpop.permute.xlu0 %626
      %628 = vrot.lane.b32.xlu0 %v625, 91
      %v629 = vpop.permute.xlu0 %628
      %vm630 = vcmask 744448
      %v631 = vsel %vm630, %v627, %v629
      %v633 = vsel %vm162, %v616, 0
      %v636 = vsel %vm166, %v631, 0
      %v639 = vsel %vm166, %v629, 0
      %641 = vmatprep.subr.bf16.mxu0 0
      %642 = vmatpush1.bf16.msra.mxu0 0
      %643 = vmatprep.subr.bf16.mxu0 0
      %644 = vmatpush1.bf16.msra.mxu0 0
      %645 = vmatprep.subr.bf16.mxu0 0
      %646 = vmatpush1.bf16.msra.mxu0 0
      %647 = vmatprep.subr.bf16.mxu0 0
      %648 = vmatpush1.bf16.msra.mxu0 0
      %649 = vmatprep.subr.bf16.mxu0 0
      %650 = vmatpush1.bf16.msra.mxu0 0
      %651 = vmatprep.subr.bf16.mxu0 0
      %652 = vmatpush1.bf16.msra.mxu0 0
      %653 = vmatprep.subr.bf16.mxu0 0
      %654 = vmatpush1.bf16.msra.mxu0 0
      %655 = vmatprep.subr.bf16.mxu0 %v639
      %656 = vmatpush1.bf16.msra.mxu0 %v636
      %657 = vmatprep.subr.bf16.mxu0 0
      %658 = vmatpush2.bf16.msra.mxu0 0
      %659 = vmatprep.subr.bf16.mxu0 0
      %660 = vmatpush2.bf16.msra.mxu0 0
      %661 = vmatprep.subr.bf16.mxu0 0
      %662 = vmatpush2.bf16.msra.mxu0 0
      %663 = vmatprep.subr.bf16.mxu0 0
      %664 = vmatpush2.bf16.msra.mxu0 0
      %665 = vmatprep.subr.bf16.mxu0 0
      %666 = vmatpush2.bf16.msra.mxu0 0
      %667 = vmatprep.subr.bf16.mxu0 0
      %668 = vmatpush2.bf16.msra.mxu0 0
      %669 = vmatprep.subr.bf16.mxu0 0
      %670 = vmatpush2.bf16.msra.mxu0 0
      %671 = vmatprep.subr.bf16.mxu0 0
      %672 = vmatpush2.bf16.msra.mxu0 0
      %673 = vmatprep.mubr.bf16.mxu0 0
      %674 = vmatmul.mubr.bf16.gmra.mxu0 %v633
      %v675 = vpop.f32.mrf.mxu0
      %v676 = vadd.f32 0.0, %v675
      %v677 = vpop.f32.mrf.mxu0
      %v678 = vadd.f32 0.0, %v677
      %v679 = vpop.f32.mrf.mxu0
      %v680 = vpop.f32.mrf.mxu0
      %681 = vdwg.mxu0
      %v682 = vadd.f32 %v612, %v676
      %v683 = vadd.f32 %v613, %v678
      %v684 = vld [vmem:[%s137] sm:$0xf]
      %s685 = scalar_lea.vmem %s1, 32
      %v686 = vld [vmem:[%s685] sm:$0xf]
      %v689 = vunpack.c.l.s4 1983009808
      %v690 = vunpack.c.0.s8 %v689
      %v691 = vlaneseq
      %v692 = vshrl.u32 %v691, 7
      %v693 = vsub.s32 %v690, %v692
      %v694 = vrot.slane %v684, %v693
      %v695 = vcombine.high %v694, %v694
      %696 = vrot.lane.b32.xlu0 %v694, 90
      %v697 = vpop.permute.xlu0 %696
      %698 = vrot.lane.b32.xlu0 %v695, 90
      %v699 = vpop.permute.xlu0 %698
      %vm700 = vcmask 736256
      %v701 = vsel %vm700, %v697, %v699
      %v703 = vsel %vm162, %v686, 0
      %v706 = vsel %vm166, %v701, 0
      %v709 = vsel %vm166, %v699, 0
      %711 = vmatprep.subr.bf16.mxu0 0
      %712 = vmatpush1.bf16.msra.mxu0 0
      %713 = vmatprep.subr.bf16.mxu0 0
      %714 = vmatpush1.bf16.msra.mxu0 0
      %715 = vmatprep.subr.bf16.mxu0 0
      %716 = vmatpush1.bf16.msra.mxu0 0
      %717 = vmatprep.subr.bf16.mxu0 0
      %718 = vmatpush1.bf16.msra.mxu0 0
      %719 = vmatprep.subr.bf16.mxu0 0
      %720 = vmatpush1.bf16.msra.mxu0 0
      %721 = vmatprep.subr.bf16.mxu0 0
      %722 = vmatpush1.bf16.msra.mxu0 0
      %723 = vmatprep.subr.bf16.mxu0 0
      %724 = vmatpush1.bf16.msra.mxu0 0
      %725 = vmatprep.subr.bf16.mxu0 %v709
      %726 = vmatpush1.bf16.msra.mxu0 %v706
      %727 = vmatprep.subr.bf16.mxu0 0
      %728 = vmatpush2.bf16.msra.mxu0 0
      %729 = vmatprep.subr.bf16.mxu0 0
      %730 = vmatpush2.bf16.msra.mxu0 0
      %731 = vmatprep.subr.bf16.mxu0 0
      %732 = vmatpush2.bf16.msra.mxu0 0
      %733 = vmatprep.subr.bf16.mxu0 0
      %734 = vmatpush2.bf16.msra.mxu0 0
      %735 = vmatprep.subr.bf16.mxu0 0
      %736 = vmatpush2.bf16.msra.mxu0 0
      %737 = vmatprep.subr.bf16.mxu0 0
      %738 = vmatpush2.bf16.msra.mxu0 0
      %739 = vmatprep.subr.bf16.mxu0 0
      %740 = vmatpush2.bf16.msra.mxu0 0
      %741 = vmatprep.subr.bf16.mxu0 0
      %742 = vmatpush2.bf16.msra.mxu0 0
      %743 = vmatprep.mubr.bf16.mxu0 0
      %744 = vmatmul.mubr.bf16.gmra.mxu0 %v703
      %v745 = vpop.f32.mrf.mxu0
      %v746 = vadd.f32 0.0, %v745
      %v747 = vpop.f32.mrf.mxu0
      %v748 = vadd.f32 0.0, %v747
      %v749 = vpop.f32.mrf.mxu0
      %v750 = vpop.f32.mrf.mxu0
      %751 = vdwg.mxu0
      %v752 = vadd.f32 %v682, %v746
      %v753 = vadd.f32 %v683, %v748
      %v754 = vlaneseq
      %v755 = vand.u32 %v754, 127
      %v756 = vadd.s32 %v755, 128
      %vm757 = vcmp.lt.s32.totalorder %v755, 0
      %v758 = vsub.s32 0, %v755
      %v759 = vsel %vm757, %v758, %v755
      %v760 = vmul.u32.u64.compose %v759, 3817748708
      %v761 = vextract.low.u32 %v760
      %v762 = vextract.high.u32 %v760
      %v763 = vshrl.u32 %v762, 4
      %v764 = vmul.u32 %v763, 18
      %v765 = vsub.s32 %v759, %v764
      %v766 = vsub.s32 0, %v765
      %v767 = vsel %vm757, %v766, %v765
      %vm768 = vcmp.lt.s32.totalorder %v756, 0
      %v769 = vsub.s32 0, %v756
      %v770 = vsel %vm768, %v769, %v756
      %v771 = vmul.u32.u64.compose %v770, 3817748708
      %v772 = vextract.low.u32 %v771
      %v773 = vextract.high.u32 %v771
      %v774 = vshrl.u32 %v773, 4
      %v775 = vmul.u32 %v774, 18
      %v776 = vsub.s32 %v770, %v775
      %v777 = vsub.s32 0, %v776
      %v778 = vsel %vm768, %v777, %v776
      %vm779 = vcmp.ne.s32.totalorder %v767, 0
      %vm780 = vcmp.ne.s32.totalorder %v778, 0
      %vm781 = vcmp.lt.s32.totalorder %v767, 0
      %vm782 = vcmp.lt.s32.totalorder %v778, 0
      %vm783 = vmand %vm781, %vm779
      %vm784 = vmand %vm782, %vm780
      %v785 = vadd.s32 %v767, 18
      %v786 = vadd.s32 %v778, 18
      %v787 = vsel %vm783, %v785, %v767
      %v788 = vsel %vm784, %v786, %v778
      %vm789 = vcmp.lt.s32.totalorder %v787, 16
      %vm790 = vcmp.lt.s32.totalorder %v788, 16
      %v791 = vsel %vm789, 1, 0
      %v792 = vsel %vm790, 1, 0
      %vm793 = vcmp.eq.s32.totalorder %v791, 1
      %vm794 = vcmp.eq.s32.totalorder %v792, 1
      %v795 = vsel %vm793, %v752, 0.0
      %v796 = vsel %vm794, %v753, 0.0
      %vm797 = vcmask 130048
      %v798 = vsel %vm797, %v796, 0.0
      %v799 = vadd.f32 %v795, %v798
      %800 = vadd.xlane.f32.xlu0 %v799
      %v801 = vpop.xlane.xlu0 %800
      %vm802 = vcmask 7168
      %803 = vst.msk [vmem:[%s141] sm:$0xff] %vm802, %v801
      %v804 = vmul.f32 %v795, %v795
      %v805 = vmul.f32 %v796, %v796
      %v806 = vsel %vm797, %v805, 0.0
      %v807 = vadd.f32 %v804, %v806
      %808 = vadd.xlane.f32.xlu0 %v807
      %v809 = vpop.xlane.xlu0 %808
      %vm810 = vcmask 15368
      %811 = vst.msk [vmem:[%s141] sm:$0xff] %vm810, %v809
      %p812 = scmp.lt.s32.totalorder %s13, 3
      %s813 = scalar_select %p812, %s13, 3
      %s814 = smul.addr %s813, 8
      %s815 = scalar_lea.vmem %s2, %s814
      // Predicated region
      $region29: #{tpu_custom_call.1} parent=27 // pred_check
        %p816 = pneg %p78
      $region30: #{tpu_custom_call.1} parent=27 // pred_check_branch
        %818 = sbr.rel (%p816) target = $region32
      $region31: #{tpu_custom_call.1} parent=27 // pred_region
        _
      $region32: #{tpu_custom_call.1} parent=27 // pred_fallthru
        _
    $region28: #{tpu_custom_call.1} parent=5 // pred_fallthru
      _
    %p819 = scmp.le.s32.totalorder 2, %s8
    // Predicated region
    $region33: #{tpu_custom_call.1} parent=5 // pred_check
      %p820 = pneg %p819
    $region34: #{tpu_custom_call.1} parent=5 // pred_check_branch
      %822 = sbr.rel (%p820) target = $region36
    $region35: #{tpu_custom_call.1} parent=5 // pred_region
      %s823 = ssub.s32 %s8, 2
      // Predicated region
      $region37: #{tpu_custom_call.1} parent=35 // pred_check
        %p824 = pneg %p84
      $region38: #{tpu_custom_call.1} parent=35 // pred_check_branch
        %826 = sbr.rel (%p824) target = $region40
      $region39: #{tpu_custom_call.1} parent=35 // pred_region
        %p827 = scmp.lt.s32.totalorder %s14, 3
        %s828 = scalar_select %p827, %s14, 3
        %s829 = smul.addr %s828, 8
        %s830 = scalar_lea.vmem %s2, %s829
      $region40: #{tpu_custom_call.1} parent=35 // pred_fallthru
        _
    $region36: #{tpu_custom_call.1} parent=5 // pred_fallthru
      _
  $region6: #{tpu_custom_call.1} parent=0 // loop_footer
    %s12 = sadd.s32 1, %s8
  $region7: #{tpu_custom_call.1} parent=0 // loop_footer_branch
    %7 = sbr.rel target = $region3
  $region8: #{tpu_custom_call.1} parent=0 // loop_exit
    _

</llo_original>
